<compile_context>
chip_gen: v5e
topology: v5e:2x2
jax: 0.10.0
libtpu: 0.0.40
codegen_flags: <defaults>
</compile_context>

<pallas_src>
import jax
import jax.numpy as jnp
import numpy as np
from jax.experimental import pallas as pl
from jax.experimental.pallas import tpu as pltpu

# Activation codes (match Searchable.fcs: 0=ReLU, 1=Sigmoid, 2=LeakyReLU).
ACT_RELU, ACT_SIGMOID, ACT_LEAKY_RELU, ACT_IDENTITY, ACT_TANH = 0, 1, 2, 3, 4

# ----------------------------------------------------------------------------
# Synthetic Searchable configuration (alphas=False path; alphasgen in the
# source is dead/broken code and not exercised).
# ----------------------------------------------------------------------------
# TODO(synk): layered_encoders are arbitrary external nn.Modules; modeled here
# as per-slot tanh(Linear) feature extractors with the shapes implied by subs.

HIDDEN = 32          # rep_size
CLASSES = 5
SUBS = [[16, 16, 24, 24],     # encoder 0 feature dims for feat indices 0..3
        [8, 16, 16, 32]]      # encoder 1 feature dims for feat indices 0..3
CONF = [[0, 1, 0],            # (feat idx enc0, feat idx enc1, nonlinearity)
        [2, 3, 1],
        [1, 0, 2]]
IN_DIMS = [20, 30]            # raw input dims per encoder
BATCH = 2
LANE = 128

N_ENC = len(IN_DIMS)
N_LAYERS = len(CONF)
N3 = N_LAYERS * LANE          # 384: merged fusion-output width (128 per layer)


def _up(n, m):
    return ((n + m - 1) // m) * m


# ----------------------------------------------------------------------------
# Static layout of the single packed parameter slab (bf16, width N3).
# Every block starts on a 16-row boundary (bf16 sublane-pair aligned).
# ----------------------------------------------------------------------------
S = [sum(s) for s in SUBS]            # merged encoder output widths [80, 72]
SP = [_up(s, 16) for s in S]          # padded widths [80, 80]
KP = [_up(d, 16) for d in IN_DIMS]    # padded input widths [32, 32]
BIAS_ROWS = 16

_r = 0
R_WE = []                             # merged encoder weights (KP[i], SP[i])
for _i in range(N_ENC):
    R_WE.append(_r); _r += KP[_i]
R_BE = []                             # merged encoder biases (1 row used)
for _i in range(N_ENC):
    R_BE.append(_r); _r += BIAS_ROWS
R_WA = []                             # merged fusion enc-weights (SP[i], N3)
for _i in range(N_ENC):
    R_WA.append(_r); _r += SP[_i]
R_BF = _r; _r += BIAS_ROWS            # fusion biases, one row, N3 wide
R_WP = [None]                         # prev-chain weights (LANE, LANE), l>=1
for _l in range(1, N_LAYERS):
    R_WP.append(_r); _r += LANE
R_WH = _r; _r += LANE                 # head weight (LANE, LANE)
R_BH = _r; _r += BIAS_ROWS            # head bias, one row
SLAB_ROWS = _r                        # 672 rows -> ~516 KB bf16 in VMEM


def _apply_act(y, act):
    if act == ACT_RELU:
        return jnp.maximum(y, 0.0)
    if act == ACT_SIGMOID:
        # reciprocal on the EUP slot (free vs. VALU divide).
        return pl.reciprocal(1.0 + jnp.exp(-y), approx=True)
    if act == ACT_LEAKY_RELU:
        return jnp.where(y > 0.0, y, 0.01 * y)    # nn.LeakyReLU default slope
    if act == ACT_TANH:
        return jnp.tanh(y)
    return y                                       # identity


# ----------------------------------------------------------------------------
# The single fused kernel.  Refs: x_0, x_1, packed param slab, output (BP,128).
# All slab reads are static, row-16 / lane-0 aligned slices (free).
# ----------------------------------------------------------------------------
def _fused_kernel(*refs):
    *x_refs, p_ref, o_ref = refs
    bf16, f32 = jnp.bfloat16, jnp.float32

    # Encoders: one merged tanh(Linear) per modality (slot 0 never computed,
    # forward() discards it via `[1:]`).
    encs = []
    for i in range(N_ENC):
        w = p_ref[R_WE[i]:R_WE[i] + KP[i], :SP[i]]
        b = p_ref[R_BE[i]:R_BE[i] + 1, :SP[i]].astype(f32)
        encs.append(jnp.tanh(
            jnp.dot(x_refs[i][...].astype(bf16), w,
                    preferred_element_type=f32) + b))

    # All three fusion layers' encoder contributions in ONE matmul per encoder
    # (per-layer weights are row-zero-padded and concatenated along N, each
    # layer occupying its own 128-lane band -> later reads are lane-aligned).
    pre = p_ref[R_BF:R_BF + 1, :].astype(f32)             # (1, N3) biases
    for i in range(N_ENC):
        pre = pre + jnp.dot(encs[i].astype(bf16),
                            p_ref[R_WA[i]:R_WA[i] + SP[i], :],
                            preferred_element_type=f32)   # (BP, N3)

    # Layer chain: only the previous-output matmul remains per layer.
    # Padded lanes stay harmless: prev/head weights have zero rows >= HIDDEN.
    out = None
    for l, row in enumerate(CONF):
        y = pre[:, l * LANE:(l + 1) * LANE]
        if l > 0:
            wp = p_ref[R_WP[l]:R_WP[l] + LANE, :LANE]
            y = y + jnp.dot(out.astype(bf16), wp, preferred_element_type=f32)
        out = _apply_act(y, int(row[-1]))

    # Classification head (identity activation), lane-dense unmasked store.
    wh = p_ref[R_WH:R_WH + LANE, :LANE]
    bh = p_ref[R_BH:R_BH + 1, :LANE].astype(f32)
    head = jnp.dot(out.astype(bf16), wh, preferred_element_type=f32) + bh
    o_ref[...] = head.astype(o_ref.dtype)


# ----------------------------------------------------------------------------
# One-time parameter packing (host-side; NOT in the per-call path).
# ----------------------------------------------------------------------------
def prepare_params(params):
    slab = np.zeros((SLAB_ROWS, N3), np.float32)
    offs = [np.concatenate([[0], np.cumsum(SUBS[i])]) for i in range(N_ENC)]

    # Merged encoder projections (slots 1..4 only).
    for i in range(N_ENC):
        ws = [np.asarray(w) for (w, _) in params["encoders"][i][1:]]
        bs = [np.asarray(b) for (_, b) in params["encoders"][i][1:]]
        slab[R_WE[i]:R_WE[i] + IN_DIMS[i], :S[i]] = np.concatenate(ws, axis=1)
        slab[R_BE[i], :S[i]] = np.concatenate(bs, axis=1)[0]

    # Fusion layers: per-encoder row-zero-padded weights merged along N
    # (layer l lives in lanes [l*LANE, l*LANE+HIDDEN)); prev-chain weights
    # zero-padded to (LANE, LANE).
    for l, row in enumerate(CONF):
        w, b = params["fusion"][l]
        w = np.asarray(w); b = np.asarray(b)
        roff = 0
        for i in range(N_ENC):
            slot = int(row[i]); d = SUBS[i][slot]
            r0 = R_WA[i] + int(offs[i][slot])
            slab[r0:r0 + d, l * LANE:l * LANE + HIDDEN] = w[roff:roff + d, :]
            roff += d
        if l > 0:
            slab[R_WP[l]:R_WP[l] + HIDDEN, :HIDDEN] = w[roff:roff + HIDDEN, :]
        slab[R_BF, l * LANE:l * LANE + HIDDEN] = b[0]

    # Head, zero-padded to (LANE, LANE) / one LANE-wide bias row.
    wh, bh = params["head"]
    slab[R_WH:R_WH + HIDDEN, :CLASSES] = np.asarray(wh)
    slab[R_BH, :CLASSES] = np.asarray(bh)[0]

    return jnp.asarray(slab, dtype=jnp.bfloat16)


# ----------------------------------------------------------------------------
# Steady-state forward: pad inputs, one gridless pallas_call, slice output.
# ----------------------------------------------------------------------------
def searchable_forward_fused(packed_slab, inputs):
    batch = inputs[0].shape[0]
    bp = _up(batch, 8)                       # full sublane group for MXU/store
    xs = [jnp.pad(x.astype(jnp.float32),
                  ((0, bp - x.shape[0]), (0, KP[i] - x.shape[1])))
          for i, x in enumerate(inputs)]

    vmem = pl.BlockSpec(memory_space=pltpu.MemorySpace.VMEM)
    out_padded = pl.pallas_call(
        _fused_kernel,
        out_shape=jax.ShapeDtypeStruct((bp, LANE), jnp.float32),
        in_specs=[vmem] * (len(xs) + 1),
        out_specs=vmem,
    )(*xs, packed_slab)
    return out_padded[:batch, :CLASSES]


# ----------------------------------------------------------------------------
# Parameter init + pure-JAX reference (mirrors Searchable.forward exactly).
# ----------------------------------------------------------------------------
def _init_linear(key, k, n, scale=0.1):
    kw, kb = jax.random.split(key)
    w = scale * jax.random.normal(kw, (k, n), jnp.float32)
    b = scale * jax.random.normal(kb, (1, n), jnp.float32)
    return w, b


def init_params(key):
    params = {"encoders": [], "fusion": [], "head": None}
    # Encoders: each produces 5 features; slot 0 is discarded by `[1:]`,
    # slots 1..4 have dims SUBS[i][0..3].
    for i in range(N_ENC):
        out_dims = [8] + list(SUBS[i])
        enc = []
        for d in out_dims:
            key, sub = jax.random.split(key)
            enc.append(_init_linear(sub, IN_DIMS[i], d))
        params["encoders"].append(enc)
    # Fusion layers (see Searchable.fcs for in_size arithmetic).
    for layer, row in enumerate(CONF):
        in_size = sum(SUBS[j][row[j]] for j in range(N_ENC))
        if layer > 0:
            in_size += HIDDEN
        key, sub = jax.random.split(key)
        params["fusion"].append(_init_linear(sub, in_size, HIDDEN))
    key, sub = jax.random.split(key)
    params["head"] = _init_linear(sub, HIDDEN, CLASSES)
    return params


def _ref_linear_act(x, w, b, act):
    y = jnp.dot(x, w, precision=jax.lax.Precision.HIGHEST) + b
    if act == ACT_RELU:
        return jnp.maximum(y, 0.0)
    if act == ACT_SIGMOID:
        return 1.0 / (1.0 + jnp.exp(-y))
    if act == ACT_LEAKY_RELU:
        return jnp.where(y > 0.0, y, 0.01 * y)
    if act == ACT_TANH:
        return jnp.tanh(y)
    return y


def searchable_forward_ref(params, inputs):
    """Faithful pure-JAX mirror of Searchable.forward (alphas=False)."""
    features = []
    for i, x in enumerate(inputs):
        all_feats = [_ref_linear_act(x, w, b, ACT_TANH)
                     for (w, b) in params["encoders"][i]]
        feat = all_feats[1:]                          # drop first, as in forward
        features.append([feat[row[i]] for row in CONF])

    out = None
    for layer, row in enumerate(CONF):
        feats = [f[layer] for f in features]
        if layer == 0:
            fused = jnp.concatenate(feats, axis=1)
        else:
            fused = jnp.concatenate(feats + [out], axis=1)
        w, b = params["fusion"][layer]
        out = _ref_linear_act(fused, w, b, row[-1])
    wh, bh = params["head"]
    return _ref_linear_act(out, wh, bh, ACT_IDENTITY)


if __name__ == "__main__":
    key = jax.random.PRNGKey(0)
    key, kp, k0, k1 = jax.random.split(key, 4)
    params = init_params(kp)
    inputs = [
        jax.random.normal(k0, (BATCH, IN_DIMS[0]), jnp.float32),
        jax.random.normal(k1, (BATCH, IN_DIMS[1]), jnp.float32),
    ]

    # One-time packing; steady-state call is just the single pallas_call.
    packed = prepare_params(params)
    fwd = jax.jit(searchable_forward_fused)

    out = fwd(packed, inputs)
    out = jax.block_until_ready(out)
    assert out.shape == (BATCH, CLASSES), out.shape

    ref = searchable_forward_ref(params, inputs)
    ref = jax.block_until_ready(ref)
    # Tolerance accounts for bf16 matmul operands (f32 accumulation), the
    # fused/reordered accumulation, and the EUP approx reciprocal in sigmoid.
    if not np.allclose(np.asarray(out), np.asarray(ref), rtol=5e-2, atol=3e-2):
        raise AssertionError("Pallas output mismatch vs JAX reference")

    print("KERNEL_OK")
</pallas_src>

<mosaic_0001>
module attributes {stable_mosaic.version = 11 : i64} {
  func.func @_fused_kernel(%arg0: memref<8x32xf32, #tpu.memory_space<vmem>>, %arg1: memref<8x32xf32, #tpu.memory_space<vmem>>, %arg2: memref<672x384xbf16, #tpu.memory_space<vmem>>, %arg3: memref<8x128xf32, #tpu.memory_space<vmem>>) attributes {dimension_semantics = [], scalar_prefetch = 0 : i64, scratch_operands = 0 : i64, tpu.core_type = #tpu.core_type<tc>} {
    %c0 = arith.constant 0 : index
    %c0_0 = arith.constant 0 : index
    %0 = vector.load %arg2[%c0, %c0_0] : memref<672x384xbf16, #tpu.memory_space<vmem>>, vector<32x80xbf16>
    %c64 = arith.constant 64 : index
    %c0_1 = arith.constant 0 : index
    %1 = vector.load %arg2[%c64, %c0_1] : memref<672x384xbf16, #tpu.memory_space<vmem>>, vector<1x80xbf16>
    %2 = arith.extf %1 : vector<1x80xbf16> to vector<1x80xf32>
    %c0_2 = arith.constant 0 : index
    %c0_3 = arith.constant 0 : index
    %3 = vector.load %arg0[%c0_2, %c0_3] : memref<8x32xf32, #tpu.memory_space<vmem>>, vector<8x32xf32>
    %4 = arith.truncf %3 : vector<8x32xf32> to vector<8x32xbf16>
    %cst = arith.constant dense<0.000000e+00> : vector<8x80xf32>
    %5 = tpu.matmul %4, %0, %cst {dimension_numbers = #tpu.dot_dimension_numbers<[1], [0], [0], [1], [0, 0, 1, 1], [], []>} : vector<8x32xbf16>, vector<32x80xbf16>, vector<8x80xf32> -> vector<8x80xf32>
    %6 = vector.broadcast %2 : vector<1x80xf32> to vector<8x80xf32>
    %7 = arith.addf %5, %6 : vector<8x80xf32>
    %8 = math.tanh %7 : vector<8x80xf32>
    %c32 = arith.constant 32 : index
    %c0_4 = arith.constant 0 : index
    %9 = vector.load %arg2[%c32, %c0_4] : memref<672x384xbf16, #tpu.memory_space<vmem>>, vector<32x80xbf16>
    %c80 = arith.constant 80 : index
    %c0_5 = arith.constant 0 : index
    %10 = vector.load %arg2[%c80, %c0_5] : memref<672x384xbf16, #tpu.memory_space<vmem>>, vector<1x80xbf16>
    %11 = arith.extf %10 : vector<1x80xbf16> to vector<1x80xf32>
    %c0_6 = arith.constant 0 : index
    %c0_7 = arith.constant 0 : index
    %12 = vector.load %arg1[%c0_6, %c0_7] : memref<8x32xf32, #tpu.memory_space<vmem>>, vector<8x32xf32>
    %13 = arith.truncf %12 : vector<8x32xf32> to vector<8x32xbf16>
    %cst_8 = arith.constant dense<0.000000e+00> : vector<8x80xf32>
    %14 = tpu.matmul %13, %9, %cst_8 {dimension_numbers = #tpu.dot_dimension_numbers<[1], [0], [0], [1], [0, 0, 1, 1], [], []>} : vector<8x32xbf16>, vector<32x80xbf16>, vector<8x80xf32> -> vector<8x80xf32>
    %15 = vector.broadcast %11 : vector<1x80xf32> to vector<8x80xf32>
    %16 = arith.addf %14, %15 : vector<8x80xf32>
    %17 = math.tanh %16 : vector<8x80xf32>
    %c256 = arith.constant 256 : index
    %c0_9 = arith.constant 0 : index
    %18 = vector.load %arg2[%c256, %c0_9] : memref<672x384xbf16, #tpu.memory_space<vmem>>, vector<1x384xbf16>
    %19 = arith.extf %18 : vector<1x384xbf16> to vector<1x384xf32>
    %20 = arith.truncf %8 : vector<8x80xf32> to vector<8x80xbf16>
    %c96 = arith.constant 96 : index
    %c0_10 = arith.constant 0 : index
    %21 = vector.load %arg2[%c96, %c0_10] : memref<672x384xbf16, #tpu.memory_space<vmem>>, vector<80x384xbf16>
    %cst_11 = arith.constant dense<0.000000e+00> : vector<8x384xf32>
    %22 = tpu.matmul %20, %21, %cst_11 {dimension_numbers = #tpu.dot_dimension_numbers<[1], [0], [0], [1], [0, 0, 1, 1], [], []>} : vector<8x80xbf16>, vector<80x384xbf16>, vector<8x384xf32> -> vector<8x384xf32>
    %23 = vector.broadcast %19 : vector<1x384xf32> to vector<8x384xf32>
    %24 = arith.addf %23, %22 : vector<8x384xf32>
    %25 = arith.truncf %17 : vector<8x80xf32> to vector<8x80xbf16>
    %c176 = arith.constant 176 : index
    %c0_12 = arith.constant 0 : index
    %26 = vector.load %arg2[%c176, %c0_12] : memref<672x384xbf16, #tpu.memory_space<vmem>>, vector<80x384xbf16>
    %cst_13 = arith.constant dense<0.000000e+00> : vector<8x384xf32>
    %27 = tpu.matmul %25, %26, %cst_13 {dimension_numbers = #tpu.dot_dimension_numbers<[1], [0], [0], [1], [0, 0, 1, 1], [], []>} : vector<8x80xbf16>, vector<80x384xbf16>, vector<8x384xf32> -> vector<8x384xf32>
    %28 = arith.addf %24, %27 : vector<8x384xf32>
    %29 = vector.extract_strided_slice %28 {offsets = [0, 0], sizes = [8, 128], strides = [1, 1]} : vector<8x384xf32> to vector<8x128xf32>
    %cst_14 = arith.constant 0.000000e+00 : f32
    %30 = vector.broadcast %cst_14 : f32 to vector<8x128xf32>
    %31 = arith.maximumf %29, %30 : vector<8x128xf32>
    %32 = vector.extract_strided_slice %28 {offsets = [0, 128], sizes = [8, 128], strides = [1, 1]} : vector<8x384xf32> to vector<8x128xf32>
    %c272 = arith.constant 272 : index
    %c0_15 = arith.constant 0 : index
    %33 = vector.load %arg2[%c272, %c0_15] : memref<672x384xbf16, #tpu.memory_space<vmem>>, vector<128x128xbf16>
    %34 = arith.truncf %31 : vector<8x128xf32> to vector<8x128xbf16>
    %cst_16 = arith.constant dense<0.000000e+00> : vector<8x128xf32>
    %35 = tpu.matmul %34, %33, %cst_16 {dimension_numbers = #tpu.dot_dimension_numbers<[1], [0], [0], [1], [0, 0, 1, 1], [], []>} : vector<8x128xbf16>, vector<128x128xbf16>, vector<8x128xf32> -> vector<8x128xf32>
    %36 = arith.addf %32, %35 : vector<8x128xf32>
    %cst_17 = arith.constant 0.000000e+00 : f32
    %37 = vector.broadcast %cst_17 : f32 to vector<8x128xf32>
    %38 = arith.subf %37, %36 : vector<8x128xf32>
    %39 = math.exp %38 : vector<8x128xf32>
    %cst_18 = arith.constant 1.000000e+00 : f32
    %40 = vector.broadcast %cst_18 : f32 to vector<8x128xf32>
    %41 = arith.addf %40, %39 : vector<8x128xf32>
    %42 = tpu.reciprocal %41 {approx = true} : vector<8x128xf32> -> vector<8x128xf32>
    %43 = vector.extract_strided_slice %28 {offsets = [0, 256], sizes = [8, 128], strides = [1, 1]} : vector<8x384xf32> to vector<8x128xf32>
    %c400 = arith.constant 400 : index
    %c0_19 = arith.constant 0 : index
    %44 = vector.load %arg2[%c400, %c0_19] : memref<672x384xbf16, #tpu.memory_space<vmem>>, vector<128x128xbf16>
    %45 = arith.truncf %42 : vector<8x128xf32> to vector<8x128xbf16>
    %cst_20 = arith.constant dense<0.000000e+00> : vector<8x128xf32>
    %46 = tpu.matmul %45, %44, %cst_20 {dimension_numbers = #tpu.dot_dimension_numbers<[1], [0], [0], [1], [0, 0, 1, 1], [], []>} : vector<8x128xbf16>, vector<128x128xbf16>, vector<8x128xf32> -> vector<8x128xf32>
    %47 = arith.addf %43, %46 : vector<8x128xf32>
    %cst_21 = arith.constant 0.000000e+00 : f32
    %48 = vector.broadcast %cst_21 : f32 to vector<8x128xf32>
    %49 = arith.cmpf ogt, %47, %48 : vector<8x128xf32>
    %cst_22 = arith.constant 0.00999999977 : f32
    %50 = vector.broadcast %cst_22 : f32 to vector<8x128xf32>
    %51 = arith.mulf %50, %47 : vector<8x128xf32>
    %52 = arith.select %49, %47, %51 : vector<8x128xi1>, vector<8x128xf32>
    %c528 = arith.constant 528 : index
    %c0_23 = arith.constant 0 : index
    %53 = vector.load %arg2[%c528, %c0_23] : memref<672x384xbf16, #tpu.memory_space<vmem>>, vector<128x128xbf16>
    %c656 = arith.constant 656 : index
    %c0_24 = arith.constant 0 : index
    %54 = vector.load %arg2[%c656, %c0_24] : memref<672x384xbf16, #tpu.memory_space<vmem>>, vector<1x128xbf16>
    %55 = arith.extf %54 : vector<1x128xbf16> to vector<1x128xf32>
    %56 = arith.truncf %52 : vector<8x128xf32> to vector<8x128xbf16>
    %cst_25 = arith.constant dense<0.000000e+00> : vector<8x128xf32>
    %57 = tpu.matmul %56, %53, %cst_25 {dimension_numbers = #tpu.dot_dimension_numbers<[1], [0], [0], [1], [0, 0, 1, 1], [], []>} : vector<8x128xbf16>, vector<128x128xbf16>, vector<8x128xf32> -> vector<8x128xf32>
    %58 = vector.broadcast %55 : vector<1x128xf32> to vector<8x128xf32>
    %59 = arith.addf %57, %58 : vector<8x128xf32>
    %c0_26 = arith.constant 0 : index
    %c0_27 = arith.constant 0 : index
    %60 = vector.load %arg3[%c0_26, %c0_27] : memref<8x128xf32, #tpu.memory_space<vmem>>, vector<8x128xf32>
    tpu.vector_store %arg3[%c0_26, %c0_27], %59 {strides = array<i32>} : memref<8x128xf32, #tpu.memory_space<vmem>>, vector<8x128xf32>,
    return
  }
}

</mosaic_0001>

<llo_original>
// kernel: searchable_forward_fused.1
$region0: #{searchable_forward_fused.1}
  #allocation0 [shape = 'u32[]', space=smem, size = 0x4, offset = 0x4, fixed_abs, tag = 'smem constant byte address 0x4 - core index']
  #allocation1 [shape = 'u32[72,128]{1,0:T(1,128)}', space=vmem, size = 0x9000, scoped, tag = 'internal scratch']
  %s0 = inlined_call_operand.vmem [shape: f32[8,32], index: 0, kind: input, shape index: {}]
  %s1 = inlined_call_operand.vmem [shape: f32[8,32], index: 1, kind: input, shape index: {}]
  %s2 = inlined_call_operand.hbm [shape: bf16[672,384], index: 2, kind: input, shape index: {}]
  %s3 = inlined_call_operand.vmem [shape: f32[8,128], index: 3, kind: output, shape index: {}]
  %s4 = sld [smem:[#allocation0]]
  $region26: #{searchable_forward_fused.1} parent=0
    _
  %s6 = ssub.s32 1, %s4
  %s7 = scalar_select 0, %s6, %s4
  $region1: #{searchable_forward_fused.1} parent=0
    #allocation2 [shape = 'u8[516096]{0}', space=vmem, size = 0x7e000, scoped, tag = 'input window, operand 2, single buffered']
    #allocation3 [shape = 's32[1]{0}', space=sflag, size = 0x4, scoped, tag = 'scoped memory for searchable_forward_fused.1']
    %8 = vsyncpa [#allocation3], 0
    // Predicated region
    $region2: #{searchable_forward_fused.1} parent=1 // pred_check
      _
    $region3: #{searchable_forward_fused.1} parent=1 // pred_check_branch
      %10 = sbr.rel (0) target = $region5
    $region4: #{searchable_forward_fused.1} parent=1 // pred_region
      _
    $region5: #{searchable_forward_fused.1} parent=1 // pred_fallthru
      _
    // Predicated region
    $region6: #{searchable_forward_fused.1} parent=1 // pred_check
      _
    $region7: #{searchable_forward_fused.1} parent=1 // pred_check_branch
      %12 = sbr.rel (0) target = $region9
    $region8: #{searchable_forward_fused.1} parent=1 // pred_region
      _
    $region9: #{searchable_forward_fused.1} parent=1 // pred_fallthru
      _
    // Predicated region
    $region10: #{searchable_forward_fused.1} parent=1 // pred_check
      _
    $region11: #{searchable_forward_fused.1} parent=1 // pred_check_branch
      %14 = sbr.rel (0) target = $region13
    $region12: #{searchable_forward_fused.1} parent=1 // pred_region
      %16 = vsyncadd [#allocation3], 0
      %s17 = sshll.u32 %s2, 4
      %s18 = int_to_ptr.hbm [resolvable:$true] %s17
      %s19 = sshll.u32 [#allocation2], 4
      %s20 = int_to_ptr.vmem [resolvable:$true] %s19
      %25 = dma.hbm_to_vmem [thread:$0]  %s18, 16128, %s20, [#allocation3], 192, 192, 12
    $region13: #{searchable_forward_fused.1} parent=1 // pred_fallthru
      _
    // Predicated region
    $region14: #{searchable_forward_fused.1} parent=1 // pred_check
      _
    $region15: #{searchable_forward_fused.1} parent=1 // pred_check_branch
      %27 = sbr.rel (0) target = $region17
    $region16: #{searchable_forward_fused.1} parent=1 // pred_region
      %29 = dma.done [#allocation3], 16128
    $region17: #{searchable_forward_fused.1} parent=1 // pred_fallthru
      _
    %v31 = vld [vmem:[#allocation2] sm:$0xf]
    %v32 = vld [vmem:[#allocation2 + $0xc] sm:$0xf]
    %v33 = vld [vmem:[#allocation2 + $0x18] sm:$0xf]
    %v34 = vld [vmem:[#allocation2 + $0x24] sm:$0xf]
    %v35 = vld [vmem:[#allocation2 + $0x60] sm:$0x1]
    %v36 = vunpack.c.l.bf16 %v35
    %v37 = vld [vmem:[%s0] sm:$0xff]
    %v38 = vpack.c.bf16 %v37, %v37
    %v39 = vperm.slane %v36, 0
    %v44 = vunpack.c.l.b16 %v31
    %v45 = vunpack.c.l.b16 %v32
    %v46 = vunpack.c.l.b16 %v33
    %v47 = vunpack.c.l.b16 %v34
    %v48 = vpack.c.b16 %v45, %v44
    %v49 = vpack.c.b16 %v47, %v46
    %vm52 = vcmask 261120
    %v54 = vsel %vm52, %v38, 0
    %56 = vmatpush.bf16.msra.mxu0 0
    %57 = vmatpush.bf16.msra.mxu0 0
    %58 = vmatpush.bf16.msra.mxu0 0
    %59 = vmatpush.bf16.msra.mxu0 0
    %60 = vmatpush.bf16.msra.mxu0 0
    %61 = vmatpush.bf16.msra.mxu0 0
    %62 = vmatpush.bf16.msra.mxu0 %v49
    %63 = vmatpush.bf16.msra.mxu0 %v48
    %64 = vmatmul.bf16.gmra.mxu0 %v54
    %v65 = vpop.f32.mrf.mxu0
    %v66 = vadd.f32 %v39, %v65
    %v67 = vpop.f32.mrf.mxu0
    %68 = vdwg.mxu0
    %v69 = vtanh.pop %v66
    %v70 = vld [vmem:[#allocation2 + $0x30] sm:$0xf]
    %v71 = vld [vmem:[#allocation2 + $0x3c] sm:$0xf]
    %v72 = vld [vmem:[#allocation2 + $0x48] sm:$0xf]
    %v73 = vld [vmem:[#allocation2 + $0x54] sm:$0xf]
    %v74 = vld [vmem:[#allocation2 + $0x78] sm:$0x1]
    %v75 = vunpack.c.l.bf16 %v74
    %v76 = vld [vmem:[%s1] sm:$0xff]
    %v77 = vpack.c.bf16 %v76, %v76
    %v78 = vperm.slane %v75, 0
    %v83 = vunpack.c.l.b16 %v70
    %v84 = vunpack.c.l.b16 %v71
    %v85 = vunpack.c.l.b16 %v72
    %v86 = vunpack.c.l.b16 %v73
    %v87 = vpack.c.b16 %v84, %v83
    %v88 = vpack.c.b16 %v86, %v85
    %v92 = vsel %vm52, %v77, 0
    %94 = vmatpush.bf16.msra.mxu0 0
    %95 = vmatpush.bf16.msra.mxu0 0
    %96 = vmatpush.bf16.msra.mxu0 0
    %97 = vmatpush.bf16.msra.mxu0 0
    %98 = vmatpush.bf16.msra.mxu0 0
    %99 = vmatpush.bf16.msra.mxu0 0
    %100 = vmatpush.bf16.msra.mxu0 %v88
    %101 = vmatpush.bf16.msra.mxu0 %v87
    %102 = vmatmul.bf16.gmra.mxu0 %v92
    %v103 = vpop.f32.mrf.mxu0
    %v104 = vadd.f32 %v78, %v103
    %v105 = vpop.f32.mrf.mxu0
    %106 = vdwg.mxu0
    %v107 = vtanh.pop %v104
    %v108 = vld [vmem:[#allocation2 + $0x180] sm:$0x11]
    %v109 = vld [vmem:[#allocation2 + $0x188] sm:$0x1]
    %v110 = vunpack.c.l.bf16 %v108
    %v111 = vunpack.c.h.bf16 %v108
    %v112 = vunpack.c.l.bf16 %v109
    %v113 = vpack.c.bf16 %v69, %v69
    %v114 = vld [vmem:[#allocation2 + $0x90] sm:$0xff]
    %v115 = vld [vmem:[#allocation2 + $0x98] sm:$0xf]
    %v116 = vld [vmem:[#allocation2 + $0x9c] sm:$0xff]
    %v117 = vld [vmem:[#allocation2 + $0xa4] sm:$0xf]
    %v118 = vld [vmem:[#allocation2 + $0xa8] sm:$0xff]
    %v119 = vld [vmem:[#allocation2 + $0xb0] sm:$0xf]
    %v120 = vld [vmem:[#allocation2 + $0xb4] sm:$0xff]
    %v121 = vld [vmem:[#allocation2 + $0xbc] sm:$0xf]
    %v122 = vld [vmem:[#allocation2 + $0xc0] sm:$0xff]
    %v123 = vld [vmem:[#allocation2 + $0xc8] sm:$0xf]
    %v124 = vld [vmem:[#allocation2 + $0xcc] sm:$0xff]
    %v125 = vld [vmem:[#allocation2 + $0xd4] sm:$0xf]
    %v126 = vld [vmem:[#allocation2 + $0xd8] sm:$0xff]
    %v127 = vld [vmem:[#allocation2 + $0xe0] sm:$0xf]
    %v128 = vld [vmem:[#allocation2 + $0xe4] sm:$0xff]
    %v129 = vld [vmem:[#allocation2 + $0xec] sm:$0xf]
    %v130 = vld [vmem:[#allocation2 + $0xf0] sm:$0xff]
    %v131 = vld [vmem:[#allocation2 + $0xf8] sm:$0xf]
    %v132 = vld [vmem:[#allocation2 + $0xfc] sm:$0xff]
    %v133 = vld [vmem:[#allocation2 + $0x104] sm:$0xf]
    %v154 = vunpack.c.l.b16 %v114
    %v155 = vunpack.c.h.b16 %v114
    %v156 = vunpack.c.l.b16 %v115
    %v157 = vunpack.c.l.b16 %v116
    %v158 = vunpack.c.h.b16 %v116
    %v159 = vunpack.c.l.b16 %v117
    %v160 = vunpack.c.l.b16 %v118
    %v161 = vunpack.c.h.b16 %v118
    %v162 = vunpack.c.l.b16 %v119
    %v163 = vunpack.c.l.b16 %v120
    %v164 = vunpack.c.h.b16 %v120
    %v165 = vunpack.c.l.b16 %v121
    %v166 = vunpack.c.l.b16 %v122
    %v167 = vunpack.c.h.b16 %v122
    %v168 = vunpack.c.l.b16 %v123
    %v169 = vunpack.c.l.b16 %v124
    %v170 = vunpack.c.h.b16 %v124
    %v171 = vunpack.c.l.b16 %v125
    %v172 = vunpack.c.l.b16 %v126
    %v173 = vunpack.c.h.b16 %v126
    %v174 = vunpack.c.l.b16 %v127
    %v175 = vunpack.c.l.b16 %v128
    %v176 = vunpack.c.h.b16 %v128
    %v177 = vunpack.c.l.b16 %v129
    %v178 = vunpack.c.l.b16 %v130
    %v179 = vunpack.c.h.b16 %v130
    %v180 = vunpack.c.l.b16 %v131
    %v181 = vunpack.c.l.b16 %v132
    %v182 = vunpack.c.h.b16 %v132
    %v183 = vunpack.c.l.b16 %v133
    %v184 = vpack.c.b16 %v157, %v154
    %v185 = vpack.c.b16 %v158, %v155
    %v186 = vpack.c.b16 %v159, %v156
    %v187 = vpack.c.b16 %v163, %v160
    %v188 = vpack.c.b16 %v164, %v161
    %v189 = vpack.c.b16 %v165, %v162
    %v190 = vpack.c.b16 %v169, %v166
    %v191 = vpack.c.b16 %v170, %v167
    %v192 = vpack.c.b16 %v171, %v168
    %v193 = vpack.c.b16 %v175, %v172
    %v194 = vpack.c.b16 %v176, %v173
    %v195 = vpack.c.b16 %v177, %v174
    %v196 = vpack.c.b16 %v181, %v178
    %v197 = vpack.c.b16 %v182, %v179
    %v198 = vpack.c.b16 %v183, %v180
    %vm214 = vcmask 654336
    %v216 = vsel %vm214, %v113, 0
    %218 = vmatpush.bf16.msra.mxu0 0
    %219 = vmatpush.bf16.msra.mxu0 0
    %220 = vmatpush.bf16.msra.mxu0 0
    %221 = vmatpush.bf16.msra.mxu0 %v196
    %222 = vmatpush.bf16.msra.mxu0 %v193
    %223 = vmatpush.bf16.msra.mxu0 %v190
    %224 = vmatpush.bf16.msra.mxu0 %v187
    %225 = vmatpush.bf16.msra.mxu0 %v184
    %226 = vmatmul.bf16.gmra.mxu0 %v216
    %v227 = vpop.f32.mrf.mxu0
    %v228 = vadd.f32 0.0, %v227
    %v229 = vpop.f32.mrf.mxu0
    %230 = vdwg.mxu0
    %231 = vmatpush.bf16.msra.mxu0 0
    %232 = vmatpush.bf16.msra.mxu0 0
    %233 = vmatpush.bf16.msra.mxu0 0
    %234 = vmatpush.bf16.msra.mxu0 %v197
    %235 = vmatpush.bf16.msra.mxu0 %v194
    %236 = vmatpush.bf16.msra.mxu0 %v191
    %237 = vmatpush.bf16.msra.mxu0 %v188
    %238 = vmatpush.bf16.msra.mxu0 %v185
    %239 = vmatmul.bf16.gmra.mxu0 %v216
    %v240 = vpop.f32.mrf.mxu0
    %v241 = vadd.f32 0.0, %v240
    %v242 = vpop.f32.mrf.mxu0
    %243 = vdwg.mxu0
    %244 = vmatpush.bf16.msra.mxu0 0
    %245 = vmatpush.bf16.msra.mxu0 0
    %246 = vmatpush.bf16.msra.mxu0 0
    %247 = vmatpush.bf16.msra.mxu0 %v198
    %248 = vmatpush.bf16.msra.mxu0 %v195
    %249 = vmatpush.bf16.msra.mxu0 %v192
    %250 = vmatpush.bf16.msra.mxu0 %v189
    %251 = vmatpush.bf16.msra.mxu0 %v186
    %252 = vmatmul.bf16.gmra.mxu0 %v216
    %v253 = vpop.f32.mrf.mxu0
    %v254 = vadd.f32 0.0, %v253
    %v255 = vpop.f32.mrf.mxu0
    %256 = vdwg.mxu0
    %v257 = vperm.slane %v110, 0
    %v258 = vperm.slane %v111, 0
    %v259 = vperm.slane %v112, 0
    %v260 = vadd.f32 %v257, %v228
    %v261 = vadd.f32 %v258, %v241
    %v262 = vadd.f32 %v259, %v254
    %v263 = vpack.c.bf16 %v107, %v107
    %v264 = vld [vmem:[#allocation2 + $0x108] sm:$0xff]
    %v265 = vld [vmem:[#allocation2 + $0x110] sm:$0xf]
    %v266 = vld [vmem:[#allocation2 + $0x114] sm:$0xff]
    %v267 = vld [vmem:[#allocation2 + $0x11c] sm:$0xf]
    %v268 = vld [vmem:[#allocation2 + $0x120] sm:$0xff]
    %v269 = vld [vmem:[#allocation2 + $0x128] sm:$0xf]
    %v270 = vld [vmem:[#allocation2 + $0x12c] sm:$0xff]
    %v271 = vld [vmem:[#allocation2 + $0x134] sm:$0xf]
    %v272 = vld [vmem:[#allocation2 + $0x138] sm:$0xff]
    %v273 = vld [vmem:[#allocation2 + $0x140] sm:$0xf]
    %v274 = vld [vmem:[#allocation2 + $0x144] sm:$0xff]
    %v275 = vld [vmem:[#allocation2 + $0x14c] sm:$0xf]
    %v276 = vld [vmem:[#allocation2 + $0x150] sm:$0xff]
    %v277 = vld [vmem:[#allocation2 + $0x158] sm:$0xf]
    %v278 = vld [vmem:[#allocation2 + $0x15c] sm:$0xff]
    %v279 = vld [vmem:[#allocation2 + $0x164] sm:$0xf]
    %v280 = vld [vmem:[#allocation2 + $0x168] sm:$0xff]
    %v281 = vld [vmem:[#allocation2 + $0x170] sm:$0xf]
    %v282 = vld [vmem:[#allocation2 + $0x174] sm:$0xff]
    %v283 = vld [vmem:[#allocation2 + $0x17c] sm:$0xf]
    %v304 = vunpack.c.l.b16 %v264
    %v305 = vunpack.c.h.b16 %v264
    %v306 = vunpack.c.l.b16 %v265
    %v307 = vunpack.c.l.b16 %v266
    %v308 = vunpack.c.h.b16 %v266
    %v309 = vunpack.c.l.b16 %v267
    %v310 = vunpack.c.l.b16 %v268
    %v311 = vunpack.c.h.b16 %v268
    %v312 = vunpack.c.l.b16 %v269
    %v313 = vunpack.c.l.b16 %v270
    %v314 = vunpack.c.h.b16 %v270
    %v315 = vunpack.c.l.b16 %v271
    %v316 = vunpack.c.l.b16 %v272
    %v317 = vunpack.c.h.b16 %v272
    %v318 = vunpack.c.l.b16 %v273
    %v319 = vunpack.c.l.b16 %v274
    %v320 = vunpack.c.h.b16 %v274
    %v321 = vunpack.c.l.b16 %v275
    %v322 = vunpack.c.l.b16 %v276
    %v323 = vunpack.c.h.b16 %v276
    %v324 = vunpack.c.l.b16 %v277
    %v325 = vunpack.c.l.b16 %v278
    %v326 = vunpack.c.h.b16 %v278
    %v327 = vunpack.c.l.b16 %v279
    %v328 = vunpack.c.l.b16 %v280
    %v329 = vunpack.c.h.b16 %v280
    %v330 = vunpack.c.l.b16 %v281
    %v331 = vunpack.c.l.b16 %v282
    %v332 = vunpack.c.h.b16 %v282
    %v333 = vunpack.c.l.b16 %v283
    %v334 = vpack.c.b16 %v307, %v304
    %v335 = vpack.c.b16 %v308, %v305
    %v336 = vpack.c.b16 %v309, %v306
    %v337 = vpack.c.b16 %v313, %v310
    %v338 = vpack.c.b16 %v314, %v311
    %v339 = vpack.c.b16 %v315, %v312
    %v340 = vpack.c.b16 %v319, %v316
    %v341 = vpack.c.b16 %v320, %v317
    %v342 = vpack.c.b16 %v321, %v318
    %v343 = vpack.c.b16 %v325, %v322
    %v344 = vpack.c.b16 %v326, %v323
    %v345 = vpack.c.b16 %v327, %v324
    %v346 = vpack.c.b16 %v331, %v328
    %v347 = vpack.c.b16 %v332, %v329
    %v348 = vpack.c.b16 %v333, %v330
    %v365 = vsel %vm214, %v263, 0
    %367 = vmatpush.bf16.msra.mxu0 0
    %368 = vmatpush.bf16.msra.mxu0 0
    %369 = vmatpush.bf16.msra.mxu0 0
    %370 = vmatpush.bf16.msra.mxu0 %v346
    %371 = vmatpush.bf16.msra.mxu0 %v343
    %372 = vmatpush.bf16.msra.mxu0 %v340
    %373 = vmatpush.bf16.msra.mxu0 %v337
    %374 = vmatpush.bf16.msra.mxu0 %v334
    %375 = vmatmul.bf16.gmra.mxu0 %v365
    %v376 = vpop.f32.mrf.mxu0
    %v377 = vadd.f32 0.0, %v376
    %v378 = vpop.f32.mrf.mxu0
    %379 = vdwg.mxu0
    %380 = vmatpush.bf16.msra.mxu0 0
    %381 = vmatpush.bf16.msra.mxu0 0
    %382 = vmatpush.bf16.msra.mxu0 0
    %383 = vmatpush.bf16.msra.mxu0 %v347
    %384 = vmatpush.bf16.msra.mxu0 %v344
    %385 = vmatpush.bf16.msra.mxu0 %v341
    %386 = vmatpush.bf16.msra.mxu0 %v338
    %387 = vmatpush.bf16.msra.mxu0 %v335
    %388 = vmatmul.bf16.gmra.mxu0 %v365
    %v389 = vpop.f32.mrf.mxu0
    %v390 = vadd.f32 0.0, %v389
    %v391 = vpop.f32.mrf.mxu0
    %392 = vdwg.mxu0
    %393 = vmatpush.bf16.msra.mxu0 0
    %394 = vmatpush.bf16.msra.mxu0 0
    %395 = vmatpush.bf16.msra.mxu0 0
    %396 = vmatpush.bf16.msra.mxu0 %v348
    %397 = vmatpush.bf16.msra.mxu0 %v345
    %398 = vmatpush.bf16.msra.mxu0 %v342
    %399 = vmatpush.bf16.msra.mxu0 %v339
    %400 = vmatpush.bf16.msra.mxu0 %v336
    %401 = vmatmul.bf16.gmra.mxu0 %v365
    %v402 = vpop.f32.mrf.mxu0
    %v403 = vadd.f32 0.0, %v402
    %v404 = vpop.f32.mrf.mxu0
    %405 = vdwg.mxu0
    %v406 = vadd.f32 %v260, %v377
    %v407 = vadd.f32 %v261, %v390
    %v408 = vadd.f32 %v262, %v403
    %v409 = vmax.f32 %v406, 0.0
    %v410 = vld [vmem:[#allocation2 + $0x198] sm:$0xf]
    %v411 = vld [vmem:[#allocation2 + $0x1a4] sm:$0xf]
    %v412 = vld [vmem:[#allocation2 + $0x1b0] sm:$0xf]
    %v413 = vld [vmem:[#allocation2 + $0x1bc] sm:$0xf]
    %v414 = vld [vmem:[#allocation2 + $0x1c8] sm:$0xf]
    %v415 = vld [vmem:[#allocation2 + $0x1d4] sm:$0xf]
    %v416 = vld [vmem:[#allocation2 + $0x1e0] sm:$0xf]
    %v417 = vld [vmem:[#allocation2 + $0x1ec] sm:$0xf]
    %v418 = vld [vmem:[#allocation2 + $0x1f8] sm:$0xf]
    %v419 = vld [vmem:[#allocation2 + $0x204] sm:$0xf]
    %v420 = vld [vmem:[#allocation2 + $0x210] sm:$0xf]
    %v421 = vld [vmem:[#allocation2 + $0x21c] sm:$0xf]
    %v422 = vld [vmem:[#allocation2 + $0x228] sm:$0xf]
    %v423 = vld [vmem:[#allocation2 + $0x234] sm:$0xf]
    %v424 = vld [vmem:[#allocation2 + $0x240] sm:$0xf]
    %v425 = vld [vmem:[#allocation2 + $0x24c] sm:$0xf]
    %v426 = vpack.c.bf16 %v409, %v409
    %v443 = vunpack.c.l.b16 %v410
    %v444 = vunpack.c.l.b16 %v411
    %v445 = vunpack.c.l.b16 %v412
    %v446 = vunpack.c.l.b16 %v413
    %v447 = vunpack.c.l.b16 %v414
    %v448 = vunpack.c.l.b16 %v415
    %v449 = vunpack.c.l.b16 %v416
    %v450 = vunpack.c.l.b16 %v417
    %v451 = vunpack.c.l.b16 %v418
    %v452 = vunpack.c.l.b16 %v419
    %v453 = vunpack.c.l.b16 %v420
    %v454 = vunpack.c.l.b16 %v421
    %v455 = vunpack.c.l.b16 %v422
    %v456 = vunpack.c.l.b16 %v423
    %v457 = vunpack.c.l.b16 %v424
    %v458 = vunpack.c.l.b16 %v425
    %v459 = vpack.c.b16 %v444, %v443
    %v460 = vpack.c.b16 %v446, %v445
    %v461 = vpack.c.b16 %v448, %v447
    %v462 = vpack.c.b16 %v450, %v449
    %v463 = vpack.c.b16 %v452, %v451
    %v464 = vpack.c.b16 %v454, %v453
    %v465 = vpack.c.b16 %v456, %v455
    %v466 = vpack.c.b16 %v458, %v457
    %475 = vmatpush.bf16.msra.mxu0 %v466
    %476 = vmatpush.bf16.msra.mxu0 %v465
    %477 = vmatpush.bf16.msra.mxu0 %v464
    %478 = vmatpush.bf16.msra.mxu0 %v463
    %479 = vmatpush.bf16.msra.mxu0 %v462
    %480 = vmatpush.bf16.msra.mxu0 %v461
    %481 = vmatpush.bf16.msra.mxu0 %v460
    %482 = vmatpush.bf16.msra.mxu0 %v459
    %483 = vmatmul.bf16.gmra.mxu0 %v426
    %v484 = vpop.f32.mrf.mxu0
    %v485 = vadd.f32 0.0, %v484
    %v486 = vpop.f32.mrf.mxu0
    %487 = vdwg.mxu0
    %v488 = vadd.f32 %v407, %v485
    %v489 = vsub.f32 0.0, %v488
    %v490 = vmul.f32 %v489, 1.442695
    %v491 = vpow.pop %v490
    %v492 = vadd.f32 %v491, 1.0
    %v493 = vrcp.pop %v492
    %v494 = vld [vmem:[#allocation2 + $0x258] sm:$0xf]
    %v495 = vld [vmem:[#allocation2 + $0x264] sm:$0xf]
    %v496 = vld [vmem:[#allocation2 + $0x270] sm:$0xf]
    %v497 = vld [vmem:[#allocation2 + $0x27c] sm:$0xf]
    %v498 = vld [vmem:[#allocation2 + $0x288] sm:$0xf]
    %v499 = vld [vmem:[#allocation2 + $0x294] sm:$0xf]
    %v500 = vld [vmem:[#allocation2 + $0x2a0] sm:$0xf]
    %v501 = vld [vmem:[#allocation2 + $0x2ac] sm:$0xf]
    %v502 = vld [vmem:[#allocation2 + $0x2b8] sm:$0xf]
    %v503 = vld [vmem:[#allocation2 + $0x2c4] sm:$0xf]
    %v504 = vld [vmem:[#allocation2 + $0x2d0] sm:$0xf]
    %v505 = vld [vmem:[#allocation2 + $0x2dc] sm:$0xf]
    %v506 = vld [vmem:[#allocation2 + $0x2e8] sm:$0xf]
    %v507 = vld [vmem:[#allocation2 + $0x2f4] sm:$0xf]
    %v508 = vld [vmem:[#allocation2 + $0x300] sm:$0xf]
    %v509 = vld [vmem:[#allocation2 + $0x30c] sm:$0xf]
    %v510 = vpack.c.bf16 %v493, %v493
    %v527 = vunpack.c.l.b16 %v494
    %v528 = vunpack.c.l.b16 %v495
    %v529 = vunpack.c.l.b16 %v496
    %v530 = vunpack.c.l.b16 %v497
    %v531 = vunpack.c.l.b16 %v498
    %v532 = vunpack.c.l.b16 %v499
    %v533 = vunpack.c.l.b16 %v500
    %v534 = vunpack.c.l.b16 %v501
    %v535 = vunpack.c.l.b16 %v502
    %v536 = vunpack.c.l.b16 %v503
    %v537 = vunpack.c.l.b16 %v504
    %v538 = vunpack.c.l.b16 %v505
    %v539 = vunpack.c.l.b16 %v506
    %v540 = vunpack.c.l.b16 %v507
    %v541 = vunpack.c.l.b16 %v508
    %v542 = vunpack.c.l.b16 %v509
    %v543 = vpack.c.b16 %v528, %v527
    %v544 = vpack.c.b16 %v530, %v529
    %v545 = vpack.c.b16 %v532, %v531
    %v546 = vpack.c.b16 %v534, %v533
    %v547 = vpack.c.b16 %v536, %v535
    %v548 = vpack.c.b16 %v538, %v537
    %v549 = vpack.c.b16 %v540, %v539
    %v550 = vpack.c.b16 %v542, %v541
    %559 = vmatpush.bf16.msra.mxu0 %v550
    %560 = vmatpush.bf16.msra.mxu0 %v549
    %561 = vmatpush.bf16.msra.mxu0 %v548
    %562 = vmatpush.bf16.msra.mxu0 %v547
    %563 = vmatpush.bf16.msra.mxu0 %v546
    %564 = vmatpush.bf16.msra.mxu0 %v545
    %565 = vmatpush.bf16.msra.mxu0 %v544
    %566 = vmatpush.bf16.msra.mxu0 %v543
    %567 = vmatmul.bf16.gmra.mxu0 %v510
    %v568 = vpop.f32.mrf.mxu0
    %v569 = vadd.f32 0.0, %v568
    %v570 = vpop.f32.mrf.mxu0
    %571 = vdwg.mxu0
    %v572 = vadd.f32 %v408, %v569
    %vm573 = vcmp.gt.f32.partialorder %v572, 0.0
    %v574 = vmul.f32 %v572, 0.01
    %v575 = vsel %vm573, %v572, %v574
    %v576 = vld [vmem:[#allocation2 + $0x318] sm:$0xf]
    %v577 = vld [vmem:[#allocation2 + $0x324] sm:$0xf]
    %v578 = vld [vmem:[#allocation2 + $0x330] sm:$0xf]
    %v579 = vld [vmem:[#allocation2 + $0x33c] sm:$0xf]
    %v580 = vld [vmem:[#allocation2 + $0x348] sm:$0xf]
    %v581 = vld [vmem:[#allocation2 + $0x354] sm:$0xf]
    %v582 = vld [vmem:[#allocation2 + $0x360] sm:$0xf]
    %v583 = vld [vmem:[#allocation2 + $0x36c] sm:$0xf]
    %v584 = vld [vmem:[#allocation2 + $0x378] sm:$0xf]
    %v585 = vld [vmem:[#allocation2 + $0x384] sm:$0xf]
    %v586 = vld [vmem:[#allocation2 + $0x390] sm:$0xf]
    %v587 = vld [vmem:[#allocation2 + $0x39c] sm:$0xf]
    %v588 = vld [vmem:[#allocation2 + $0x3a8] sm:$0xf]
    %v589 = vld [vmem:[#allocation2 + $0x3b4] sm:$0xf]
    %v590 = vld [vmem:[#allocation2 + $0x3c0] sm:$0xf]
    %v591 = vld [vmem:[#allocation2 + $0x3cc] sm:$0xf]
    %v592 = vld [vmem:[#allocation2 + $0x3d8] sm:$0x1]
    %v593 = vunpack.c.l.bf16 %v592
    %v594 = vpack.c.bf16 %v575, %v575
    %v595 = vperm.slane %v593, 0
    %v612 = vunpack.c.l.b16 %v576
    %v613 = vunpack.c.l.b16 %v577
    %v614 = vunpack.c.l.b16 %v578
    %v615 = vunpack.c.l.b16 %v579
    %v616 = vunpack.c.l.b16 %v580
    %v617 = vunpack.c.l.b16 %v581
    %v618 = vunpack.c.l.b16 %v582
    %v619 = vunpack.c.l.b16 %v583
    %v620 = vunpack.c.l.b16 %v584
    %v621 = vunpack.c.l.b16 %v585
    %v622 = vunpack.c.l.b16 %v586
    %v623 = vunpack.c.l.b16 %v587
    %v624 = vunpack.c.l.b16 %v588
    %v625 = vunpack.c.l.b16 %v589
    %v626 = vunpack.c.l.b16 %v590
    %v627 = vunpack.c.l.b16 %v591
    %v628 = vpack.c.b16 %v613, %v612
    %v629 = vpack.c.b16 %v615, %v614
    %v630 = vpack.c.b16 %v617, %v616
    %v631 = vpack.c.b16 %v619, %v618
    %v632 = vpack.c.b16 %v621, %v620
    %v633 = vpack.c.b16 %v623, %v622
    %v634 = vpack.c.b16 %v625, %v624
    %v635 = vpack.c.b16 %v627, %v626
    %644 = vmatpush.bf16.msra.mxu0 %v635
    %645 = vmatpush.bf16.msra.mxu0 %v634
    %646 = vmatpush.bf16.msra.mxu0 %v633
    %647 = vmatpush.bf16.msra.mxu0 %v632
    %648 = vmatpush.bf16.msra.mxu0 %v631
    %649 = vmatpush.bf16.msra.mxu0 %v630
    %650 = vmatpush.bf16.msra.mxu0 %v629
    %651 = vmatpush.bf16.msra.mxu0 %v628
    %652 = vmatmul.bf16.gmra.mxu0 %v594
    %v653 = vpop.f32.mrf.mxu0
    %v654 = vadd.f32 %v595, %v653
    %v655 = vpop.f32.mrf.mxu0
    %656 = vdwg.mxu0
    %657 = vst [vmem:[%s3] sm:$0xff] %v654
    // Predicated region
    $region18: #{searchable_forward_fused.1} parent=1 // pred_check
      _
    $region19: #{searchable_forward_fused.1} parent=1 // pred_check_branch
      %659 = sbr.rel (0) target = $region21
    $region20: #{searchable_forward_fused.1} parent=1 // pred_region
      _
    $region21: #{searchable_forward_fused.1} parent=1 // pred_fallthru
      _
    // Predicated region
    $region22: #{searchable_forward_fused.1} parent=1 // pred_check
      _
    $region23: #{searchable_forward_fused.1} parent=1 // pred_check_branch
      %661 = sbr.rel (0) target = $region25
    $region24: #{searchable_forward_fused.1} parent=1 // pred_region
      _
    $region25: #{searchable_forward_fused.1} parent=1 // pred_fallthru
      _
    %662 = vsyncpa [#allocation3], 1

</llo_original>
